<compile_context>
chip_gen: v7x
topology: tpu7x:2x2x1
jax: 0.10.0
libtpu: 0.0.40
codegen_flags: <defaults>
</compile_context>

<pallas_src>
import functools

import jax
import jax.numpy as jnp
from jax import lax
from jax.experimental import pallas as pl
from jax.experimental.pallas import tpu as pltpu


def _round_up(a, m):
    return ((a + m - 1) // m) * m


def _bce_kernel(c1_ref, c2_ref, pred_ref, gt_ref, out_ref, *,
                brock, binary_gt, tile_m, sub_m, n_sub, num_k,
                total_elems, needs_mask):
    """Accumulates the fully-weighted per-(batch, chunk) loss partial sums."""
    b = pl.program_id(0)
    c = pl.program_id(1)
    k = pl.program_id(2)

    @pl.when(k == 0)
    def _():
        out_ref[...] = jnp.zeros_like(out_ref)

    c1 = c1_ref[b]                       # -w_b * gamma_b
    c2 = c2_ref[b]                       # -w_b * (1 - gamma_b)
    base_row = (c * num_k + k) * tile_m  # intended (unclamped) row offset

    def step(r0, acc):
        p = pred_ref[0, pl.ds(r0, sub_m), :].astype(jnp.float32)
        g = gt_ref[0, pl.ds(r0, sub_m), :].astype(jnp.float32)

        x_hat = jnp.clip(p, 1e-5, 1.0 - 1e-5)

        if binary_gt and not brock:
            # Exactly-binary gt in {0,1}: one log per element (halves EUP load).
            pos = g > 0.5
            lv = jnp.log(jnp.where(pos, x_hat, 1.0 - x_hat))
            contrib = jnp.where(pos, c1, c2) * lv
        else:
            x = 3.0 * g - 1.0 if brock else g
            contrib = (c1 * (x * jnp.log(x_hat))
                       + c2 * ((1.0 - x) * jnp.log(1.0 - x_hat)))

        if needs_mask:
            # Mask rows/lanes past the true element count (block overhang or
            # the T%128 pad tail).  where() is a select, so garbage (even NaN)
            # in the padded region cannot leak into the sum.
            row_io = lax.broadcasted_iota(jnp.int32, (sub_m, 128), 0)
            lane_io = lax.broadcasted_iota(jnp.int32, (sub_m, 128), 1)
            eidx = (base_row + r0 + row_io) * 128 + lane_io
            contrib = jnp.where(eidx < total_elems, contrib, 0.0)

        return acc + jnp.sum(contrib, axis=0, keepdims=True)   # (1, 128)

    acc0 = jnp.zeros((1, 128), jnp.float32)
    if n_sub == 1:
        acc = step(0, acc0)
    else:
        acc = lax.fori_loop(
            0, n_sub,
            lambda s, a: step(pl.multiple_of(s * sub_m, sub_m), a),
            acc0, unroll=True)

    out_ref[...] += acc.reshape(1, 1, 1, 128)


def custom_bce_loss(pred, gt, gamma, w=None, *, brock=False, binary_gt=False,
                    max_tile_m=4096):
    """Mean BCE loss matching PiFu's CustomBCELoss.forward.

    pred, gt : [B, C, N]  (read in native dtype; math in f32)
    gamma    : scalar or [B]
    w        : None, scalar, or [B]
    binary_gt: gated single-log fast path; ONLY valid for exactly-binary gt
               with brock=False.
    """
    assert pred.shape == gt.shape and pred.ndim == 3
    B, C, N = pred.shape
    T = C * N

    gamma_v = jnp.asarray(gamma, jnp.float32).reshape(-1)
    if gamma_v.shape[0] == 1 and B != 1:
        gamma_v = jnp.broadcast_to(gamma_v, (B,))
    if gamma_v.shape != (B,):
        raise ValueError("gamma must be a scalar or have shape [B]")

    if w is None:
        w_v = jnp.ones((B,), jnp.float32)
    else:
        w_v = jnp.asarray(w, jnp.float32)
        if w_v.ndim == 0:
            w_v = jnp.broadcast_to(w_v, (B,))
        if w_v.shape != (B,):
            # TODO(synk): full-tensor w (same shape as pred) would need its own
            # tiled BlockSpec; only scalar / per-batch w is wired in here.
            raise ValueError("only scalar or per-batch [B] w is supported")

    # Fold gamma, w and the minus sign into two per-batch scalars so the kernel
    # keeps a single accumulator: loss_elem = c1*x*log(xh) + c2*(1-x)*log(1-xh).
    c1 = (-w_v * gamma_v).astype(jnp.float32)
    c2 = (-w_v * (1.0 - gamma_v)).astype(jnp.float32)

    # Lane-dense [B, M, 128] view.  Free (no HBM copy) when T % 128 == 0.
    pred_flat = pred.reshape(B, T)
    gt_flat = gt.reshape(B, T)
    if T % 128 != 0:
        # TODO(synk): this pad materializes one copy of pred/gt; a fully
        # zero-copy ragged path would need manual per-row DMA (pl.ANY).
        pad = _round_up(T, 128) - T
        pred_flat = jnp.pad(pred_flat, ((0, 0), (0, pad)))
        gt_flat = jnp.pad(gt_flat, ((0, 0), (0, pad)))
    M = pred_flat.shape[1] // 128
    pred3 = pred_flat.reshape(B, M, 128)
    gt3 = gt_flat.reshape(B, M, 128)

    # ---- tiling -------------------------------------------------------------
    max_tile_m = max(512, (max_tile_m // 512) * 512)
    if M <= 512 and not (B == 1 and M >= 16):
        # Small (PiFu-scale) path: one grid step per batch row.
        n_par, tile_m, num_k, sub_m = 1, M, 1, M
    else:
        # Keep >= 2 parallel grid units when B == 1 so both v7x TCs get work.
        n_par = 2 if B == 1 else 1
        m_par = pl.cdiv(M, n_par)
        if m_par <= 512:
            tile_m = _round_up(m_par, 8)
            sub_m = tile_m
        else:
            tile_m = min(max_tile_m, (m_par // 512) * 512)
            sub_m = 512
        num_k = pl.cdiv(m_par, tile_m)
    n_sub = tile_m // sub_m

    covered = n_par * num_k * tile_m * 128
    needs_mask = covered != T
    max_blk = pl.cdiv(M, tile_m) - 1   # clamp any fully-OOB block index

    def in_map(b_, c_, k_, *_):
        return (b_, jnp.minimum(c_ * num_k + k_, max_blk), 0)

    kernel = functools.partial(
        _bce_kernel, brock=brock, binary_gt=binary_gt, tile_m=tile_m,
        sub_m=sub_m, n_sub=n_sub, num_k=num_k, total_elems=T,
        needs_mask=needs_mask)

    elem = B * M * 128
    cost = pl.CostEstimate(
        flops=14 * elem,
        transcendentals=(1 if (binary_gt and not brock) else 2) * elem,
        bytes_accessed=pred3.size * pred3.dtype.itemsize
        + gt3.size * gt3.dtype.itemsize + B * n_par * 128 * 4)

    partial_sums = pl.pallas_call(
        kernel,
        out_shape=jax.ShapeDtypeStruct((B, n_par, 1, 128), jnp.float32),
        grid_spec=pltpu.PrefetchScalarGridSpec(
            num_scalar_prefetch=2,
            grid=(B, n_par, num_k),
            in_specs=[
                pl.BlockSpec((1, tile_m, 128), in_map),   # pred
                pl.BlockSpec((1, tile_m, 128), in_map),   # gt
            ],
            out_specs=pl.BlockSpec((1, 1, 1, 128),
                                   lambda b_, c_, k_, *_: (b_, c_, 0, 0)),
        ),
        compiler_params=pltpu.CompilerParams(
            dimension_semantics=("parallel", "parallel", "arbitrary")),
        cost_estimate=cost,
    )(c1, c2, pred3, gt3)

    # Single tiny epilogue: gamma / w / sign are already folded in-kernel.
    return jnp.sum(partial_sums) / jnp.float32(B * T)


class CustomBCELoss:
    """Thin wrapper mirroring the torch module's constructor semantics."""

    def __init__(self, brock=False, gamma=None):
        self.brock = brock
        self.gamma = gamma

    def __call__(self, pred, gt, gamma, w=None):
        g = gamma if self.gamma is None else self.gamma
        return custom_bce_loss(pred, gt, g, w, brock=self.brock)


if __name__ == "__main__":
    key = jax.random.PRNGKey(0)
    k1, k2, k3, k4 = jax.random.split(key, 4)

    B, C, N = 2, 1, 256          # PiFu: [batch, 1, num_sample_points]
    pred = jax.random.uniform(k1, (B, C, N), jnp.float32, 0.0, 1.0)
    gt = (jax.random.uniform(k2, (B, C, N), jnp.float32) > 0.5).astype(jnp.float32)
    gamma = jax.random.uniform(k3, (B,), jnp.float32, 0.3, 0.7)
    w = jax.random.uniform(k4, (B,), jnp.float32, 0.5, 1.5)

    def ref(pred, gt, gamma, w=None, brock=False):
        x_hat = jnp.clip(pred, 1e-5, 1.0 - 1e-5)
        g = gamma[:, None, None]
        x = 3.0 * gt - 1.0 if brock else gt
        loss = -(g * x * jnp.log(x_hat)
                 + (1.0 - g) * (1.0 - x) * jnp.log(1.0 - x_hat))
        if w is not None:
            loss = loss * w[:, None, None]
        return jnp.mean(loss)

    checks = []
    # 1) default path (no w)
    checks.append((custom_bce_loss(pred, gt, gamma), ref(pred, gt, gamma)))
    # 2) per-batch weights
    checks.append((custom_bce_loss(pred, gt, gamma, w), ref(pred, gt, gamma, w)))
    # 3) brock path
    checks.append((custom_bce_loss(pred, gt, gamma, w, brock=True),
                   ref(pred, gt, gamma, w, brock=True)))
    # 4) gated binary-label single-log fast path (gt here is exactly {0,1})
    checks.append((custom_bce_loss(pred, gt, gamma, w, binary_gt=True),
                   ref(pred, gt, gamma, w)))
    # 5) ragged tail (T not a multiple of 128) exercises the in-kernel mask
    Nr = 200
    pred_r = jax.random.uniform(k1, (B, C, Nr), jnp.float32, 0.0, 1.0)
    gt_r = (jax.random.uniform(k2, (B, C, Nr), jnp.float32) > 0.5).astype(jnp.float32)
    checks.append((custom_bce_loss(pred_r, gt_r, gamma, w),
                   ref(pred_r, gt_r, gamma, w)))
    # 6) B == 1: rows split across two "parallel" grid units (v7x dual-TC path)
    N1 = 4096
    pred_1 = jax.random.uniform(k3, (1, C, N1), jnp.float32, 0.0, 1.0)
    gt_1 = (jax.random.uniform(k4, (1, C, N1), jnp.float32) > 0.5).astype(jnp.float32)
    gamma_1 = jnp.array([0.55], jnp.float32)
    checks.append((custom_bce_loss(pred_1, gt_1, gamma_1, None),
                   ref(pred_1, gt_1, gamma_1)))

    for i, (got, want) in enumerate(checks):
        got = jax.block_until_ready(got)
        assert jnp.allclose(got, want, atol=3e-5, rtol=3e-5), (i, got, want)

    print("KERNEL_OK")
</pallas_src>

<mosaic_0001>
module attributes {stable_mosaic.version = 11 : i64} {
  func.func @_bce_kernel(%arg0: i32, %arg1: i32, %arg2: i32, %arg3: memref<2xf32, #tpu.memory_space<smem>>, %arg4: memref<2xf32, #tpu.memory_space<smem>>, %arg5: memref<1x2x128xf32, #tpu.memory_space<vmem>>, %arg6: memref<1x2x128xf32, #tpu.memory_space<vmem>>, %arg7: memref<1x1x1x128xf32, #tpu.memory_space<vmem>>) attributes {dimension_semantics = [#tpu.dimension_semantics<parallel>, #tpu.dimension_semantics<parallel>, #tpu.dimension_semantics<arbitrary>], iteration_bounds = array<i64: 2, 1, 1>, scalar_prefetch = 2 : i64, scratch_operands = 0 : i64, tpu.core_type = #tpu.core_type<tc>, window_params = [{transform_indices = @transform_0, window_bounds = array<i64: 1, 2, 128>}, {transform_indices = @transform_1, window_bounds = array<i64: 1, 2, 128>}, {transform_indices = @transform_2, window_bounds = array<i64: 1, 1, 1, 128>}]} {
    %c0_i32 = arith.constant 0 : i32
    %0 = arith.cmpi eq, %arg2, %c0_i32 : i32
    %1 = arith.extui %0 : i1 to i32
    %c0_i32_0 = arith.constant 0 : i32
    %2 = arith.cmpi ne, %1, %c0_i32_0 : i32
    scf.if %2 {
      %cst_19 = arith.constant 0.000000e+00 : f32
      %36 = vector.broadcast %cst_19 : f32 to vector<1x1x1x128xf32>
      %c0_20 = arith.constant 0 : index
      %c0_21 = arith.constant 0 : index
      %c0_22 = arith.constant 0 : index
      %c0_23 = arith.constant 0 : index
      %37 = vector.load %arg7[%c0_20, %c0_21, %c0_22, %c0_23] : memref<1x1x1x128xf32, #tpu.memory_space<vmem>>, vector<1x1x1x128xf32>
      tpu.vector_store %arg7[%c0_20, %c0_21, %c0_22, %c0_23], %36 {strides = array<i32>} : memref<1x1x1x128xf32, #tpu.memory_space<vmem>>, vector<1x1x1x128xf32>,
    } else {
    }
    %3 = arith.index_cast %arg0 : i32 to index
    %4 = memref.load %arg3[%3] : memref<2xf32, #tpu.memory_space<smem>>
    %5 = arith.index_cast %arg0 : i32 to index
    %6 = memref.load %arg4[%5] : memref<2xf32, #tpu.memory_space<smem>>
    %cst = arith.constant 0.000000e+00 : f32
    %7 = vector.broadcast %cst : f32 to vector<1x128xf32>
    %c0 = arith.constant 0 : index
    %c0_1 = arith.constant 0 : index
    %c0_2 = arith.constant 0 : index
    %8 = vector.load %arg5[%c0, %c0_1, %c0_2] : memref<1x2x128xf32, #tpu.memory_space<vmem>>, vector<1x2x128xf32>
    %9 = vector.shape_cast %8 : vector<1x2x128xf32> to vector<2x128xf32>
    %c0_3 = arith.constant 0 : index
    %c0_4 = arith.constant 0 : index
    %c0_5 = arith.constant 0 : index
    %10 = vector.load %arg6[%c0_3, %c0_4, %c0_5] : memref<1x2x128xf32, #tpu.memory_space<vmem>>, vector<1x2x128xf32>
    %11 = vector.shape_cast %10 : vector<1x2x128xf32> to vector<2x128xf32>
    %cst_6 = arith.constant 9.99999974E-6 : f32
    %cst_7 = arith.constant 0.999989986 : f32
    %12 = vector.broadcast %cst_6 : f32 to vector<2x128xf32>
    %13 = arith.maximumf %12, %9 : vector<2x128xf32>
    %14 = vector.broadcast %cst_7 : f32 to vector<2x128xf32>
    %15 = arith.minimumf %14, %13 : vector<2x128xf32>
    %16 = math.log %15 : vector<2x128xf32>
    %17 = arith.mulf %11, %16 : vector<2x128xf32>
    %18 = vector.broadcast %4 : f32 to vector<2x128xf32>
    %19 = arith.mulf %18, %17 : vector<2x128xf32>
    %cst_8 = arith.constant 1.000000e+00 : f32
    %20 = vector.broadcast %cst_8 : f32 to vector<2x128xf32>
    %21 = arith.subf %20, %11 : vector<2x128xf32>
    %cst_9 = arith.constant 1.000000e+00 : f32
    %22 = vector.broadcast %cst_9 : f32 to vector<2x128xf32>
    %23 = arith.subf %22, %15 : vector<2x128xf32>
    %24 = math.log %23 : vector<2x128xf32>
    %25 = arith.mulf %21, %24 : vector<2x128xf32>
    %26 = vector.broadcast %6 : f32 to vector<2x128xf32>
    %27 = arith.mulf %26, %25 : vector<2x128xf32>
    %28 = arith.addf %19, %27 : vector<2x128xf32>
    %cst_10 = arith.constant dense<0.000000e+00> : vector<128xf32>
    %29 = vector.multi_reduction <add>, %28, %cst_10 [0] : vector<2x128xf32> to vector<128xf32>
    %30 = vector.shape_cast %29 : vector<128xf32> to vector<1x128xf32>
    %31 = arith.addf %7, %30 : vector<1x128xf32>
    %c0_11 = arith.constant 0 : index
    %c0_12 = arith.constant 0 : index
    %c0_13 = arith.constant 0 : index
    %c0_14 = arith.constant 0 : index
    %32 = vector.load %arg7[%c0_11, %c0_12, %c0_13, %c0_14] : memref<1x1x1x128xf32, #tpu.memory_space<vmem>>, vector<1x1x1x128xf32>
    %33 = vector.shape_cast %31 : vector<1x128xf32> to vector<1x1x1x128xf32>
    %34 = arith.addf %32, %33 : vector<1x1x1x128xf32>
    %c0_15 = arith.constant 0 : index
    %c0_16 = arith.constant 0 : index
    %c0_17 = arith.constant 0 : index
    %c0_18 = arith.constant 0 : index
    %35 = vector.load %arg7[%c0_15, %c0_16, %c0_17, %c0_18] : memref<1x1x1x128xf32, #tpu.memory_space<vmem>>, vector<1x1x1x128xf32>
    tpu.vector_store %arg7[%c0_15, %c0_16, %c0_17, %c0_18], %34 {strides = array<i32>} : memref<1x1x1x128xf32, #tpu.memory_space<vmem>>, vector<1x1x1x128xf32>,
    return
  }
  func.func @transform_0(%arg0: i32, %arg1: i32, %arg2: i32, %arg3: memref<2xf32, #tpu.memory_space<smem>>, %arg4: memref<2xf32, #tpu.memory_space<smem>>) -> (i32, i32, i32) {
    %c1_i32 = arith.constant 1 : i32
    %0 = arith.muli %arg1, %c1_i32 : i32
    %1 = arith.addi %0, %arg2 : i32
    %c0_i32 = arith.constant 0 : i32
    %2 = arith.minsi %1, %c0_i32 : i32
    %c0_i32_0 = arith.constant 0 : i32
    %c0_i32_1 = arith.constant 0 : i32
    return %arg0, %2, %c0_i32_0 : i32, i32, i32
  }
  func.func @transform_1(%arg0: i32, %arg1: i32, %arg2: i32, %arg3: memref<2xf32, #tpu.memory_space<smem>>, %arg4: memref<2xf32, #tpu.memory_space<smem>>) -> (i32, i32, i32) {
    %c1_i32 = arith.constant 1 : i32
    %0 = arith.muli %arg1, %c1_i32 : i32
    %1 = arith.addi %0, %arg2 : i32
    %c0_i32 = arith.constant 0 : i32
    %2 = arith.minsi %1, %c0_i32 : i32
    %c0_i32_0 = arith.constant 0 : i32
    %c0_i32_1 = arith.constant 0 : i32
    return %arg0, %2, %c0_i32_0 : i32, i32, i32
  }
  func.func @transform_2(%arg0: i32, %arg1: i32, %arg2: i32, %arg3: memref<2xf32, #tpu.memory_space<smem>>, %arg4: memref<2xf32, #tpu.memory_space<smem>>) -> (i32, i32, i32, i32) {
    %c0_i32 = arith.constant 0 : i32
    %c0_i32_0 = arith.constant 0 : i32
    %c0_i32_1 = arith.constant 0 : i32
    return %arg0, %arg1, %c0_i32, %c0_i32_0 : i32, i32, i32, i32
  }
}

</mosaic_0001>

<llo_original>
// kernel: tpu_custom_call.1
$region0: #{tpu_custom_call.1}
  #allocation0 [shape = 'u32[]', space=smem, size = 0x4, offset = 0x4, fixed_abs, tag = 'smem constant byte address 0x4 - core index']
  #allocation1 [shape = 'u32[144,128]{1,0:T(1,128)}', space=vmem, size = 0x12000, scoped, tag = 'internal scratch']
  #allocation2 [shape = 's32[1]{0}', space=sflag, size = 0x4, scoped, tag = 'scoped memory for tpu_custom_call.1']
  #allocation3 [shape = 'u8[512]{0}', space=smem, size = 0x200, scoped, tag = 'prefetched SMEM operand 0']
  #allocation4 [shape = 'u8[512]{0}', space=smem, size = 0x200, scoped, tag = 'prefetched SMEM operand 1']
  %s0 = inlined_call_operand.hbm [shape: f32[2], index: 0, kind: input, shape index: {}]
  %s1 = inlined_call_operand.vmem [shape: f32[2], index: 1, kind: input, shape index: {}]
  %s2 = inlined_call_operand.vmem [shape: f32[2,2,128], index: 2, kind: input, shape index: {}]
  %s3 = inlined_call_operand.vmem [shape: f32[2,2,128], index: 3, kind: input, shape index: {}]
  %s4 = inlined_call_operand.hbm [shape: f32[2,1,1,128], index: 4, kind: output, shape index: {}]
  %s5 = sld [smem:[#allocation0]]
  $region45: #{tpu_custom_call.1} parent=0
    _
  %s7 = ssub.s32 1, %s5
  %s8 = scalar_select 0, %s7, %s5
  %10 = dma.hbm_to_smem %s0, 16, [#allocation3], [#allocation2]
  %s11 = sshll.u32 %s1, 4
  %s12 = int_to_ptr.vmem [resolvable:$true] %s11
  %14 = dma.vmem_to_smem %s12, 16, [#allocation4], [#allocation2]
  %15 = dma.done [#allocation2], 32
  %16 = sfence
  $region1: #{tpu_custom_call.1} parent=0
    #allocation5 [shape = 'u8[1024]{0}', space=vmem, size = 0x400, scoped, tag = 'output window, operand 0']
    #allocation6 [shape = 's32[2]{0}', space=sflag, size = 0x8, scoped, tag = 'scoped memory for tpu_custom_call.1']
    %17 = vsyncpa [#allocation6], 0
    %s18 = scalar_lea.sflag [#allocation6], 1
    %19 = vsyncpa %s18, 0
    loop: start=0, step=1, limit=4
    $region2: #{tpu_custom_call.1} parent=1 // loop_pre_header
      _
    $region3: #{tpu_custom_call.1} parent=1 // loop_header
      %s21 = sphi 0, %s25
      %p22 = scmp.ge.s32.totalorder %s21, 4
      %s28 = sphi 0, %s47
      %s29 = sphi 0, %s43
      %s30 = sphi 0, %s39
      %s31 = sphi 0, %s28
      %s32 = sphi 0, %s29
      %s33 = sphi 0, %s30
      %s34 = sphi 0, %s31
      %s35 = sphi 0, %s32
      %s36 = sphi 0, %s33
      %s58 = sphi 0, %s60
      %s61 = sphi 0, %s58
      %s62 = sphi 0, %s61
      %s78 = sphi 0, %s62
      %s92 = sphi 0, %s94
      %s95 = sphi 0, %s92
      %s96 = sphi 0, %s95
      %s112 = sphi 0, %s96
      %s120 = sphi 0, %s122
      %s123 = sphi 0, %s120
      %s124 = sphi 0, %s123
      %s140 = sphi 0, %s124
    $region4: #{tpu_custom_call.1} parent=1 // loop_header_branch
      %24 = sbr.rel (%p22) target = $region8
    $region5: #{tpu_custom_call.1} parent=1 // loop_body
      %s26 = ssub.s32 %s21, 1
      %s27 = ssub.s32 %s21, 2
      %s37 = sadd.s32 1, %s30
      %p38 = scmp.ge.s32.totalorder %s37, 1
      %s39 = scalar_select %p38, 0, %s37
      %s40 = sadd.s32 1, %s29
      %s41 = scalar_select %p38, %s40, %s29
      %p42 = scmp.ge.s32.totalorder %s41, 1
      %s43 = scalar_select %p42, 0, %s41
      %s44 = sadd.s32 1, %s28
      %s45 = scalar_select %p42, %s44, %s28
      %p46 = scmp.ge.s32.totalorder %s45, 2
      %s47 = scalar_select %p46, 0, %s45
      %s48 = sadd.s32 %s29, %s30
      %p49 = scmp.lt.s32.totalorder %s48, 0
      %s50 = scalar_select %p49, %s48, 0
      %s51 = sadd.s32 %s43, %s39
      %p52 = scmp.lt.s32.totalorder %s51, 0
      %s53 = scalar_select %p52, %s51, 0
      %s54 = ssub.s32 %s28, %s47
      %s55 = ssub.s32 %s50, %s53
      %s56 = sor.u32 %s54, %s55
      %p57 = scmp.eq.s32.totalorder %s56, 0
      %s59 = sadd.s32 %s58, 1
      %s60 = scalar_select %p57, %s58, %s59
      %p63 = pneg %p57
      %p64 = scmp.eq.s32.totalorder %s21, 1
      %p65 = por %p63, %p64
      %p66 = scmp.ne.s32.totalorder %s58, %s61
      %p67 = scmp.eq.s32.totalorder %s21, 0
      %p68 = por %p66, %p67
      %p69 = scmp.ne.s32.totalorder %s58, %s61
      %p70 = scmp.eq.s32.totalorder %s26, 1
      %p71 = por %p69, %p70
      %p72 = scmp.ne.s32.totalorder %s61, %s62
      %p73 = scmp.eq.s32.totalorder %s26, 0
      %p74 = por %p72, %p73
      %p75 = scmp.ne.s32.totalorder %s61, %s62
      %p76 = scmp.eq.s32.totalorder %s27, 1
      %p77 = por %p75, %p76
      %p79 = scmp.ne.s32.totalorder %s62, %s78
      %p80 = scmp.eq.s32.totalorder %s27, 0
      %p81 = por %p79, %p80
      %s82 = sadd.s32 %s29, %s30
      %p83 = scmp.lt.s32.totalorder %s82, 0
      %s84 = scalar_select %p83, %s82, 0
      %s85 = sadd.s32 %s43, %s39
      %p86 = scmp.lt.s32.totalorder %s85, 0
      %s87 = scalar_select %p86, %s85, 0
      %s88 = ssub.s32 %s28, %s47
      %s89 = ssub.s32 %s84, %s87
      %s90 = sor.u32 %s88, %s89
      %p91 = scmp.eq.s32.totalorder %s90, 0
      %s93 = sadd.s32 %s92, 1
      %s94 = scalar_select %p91, %s92, %s93
      %p97 = pneg %p91
      %p98 = scmp.eq.s32.totalorder %s21, 1
      %p99 = por %p97, %p98
      %p100 = scmp.ne.s32.totalorder %s92, %s95
      %p101 = scmp.eq.s32.totalorder %s21, 0
      %p102 = por %p100, %p101
      %p103 = scmp.ne.s32.totalorder %s92, %s95
      %p104 = scmp.eq.s32.totalorder %s26, 1
      %p105 = por %p103, %p104
      %p106 = scmp.ne.s32.totalorder %s95, %s96
      %p107 = scmp.eq.s32.totalorder %s26, 0
      %p108 = por %p106, %p107
      %p109 = scmp.ne.s32.totalorder %s95, %s96
      %p110 = scmp.eq.s32.totalorder %s27, 1
      %p111 = por %p109, %p110
      %p113 = scmp.ne.s32.totalorder %s96, %s112
      %p114 = scmp.eq.s32.totalorder %s27, 0
      %p115 = por %p113, %p114
      %s116 = ssub.s32 %s28, %s47
      %s117 = ssub.s32 %s29, %s43
      %s118 = sor.u32 %s116, %s117
      %p119 = scmp.eq.s32.totalorder %s118, 0
      %s121 = sadd.s32 %s120, 1
      %s122 = scalar_select %p119, %s120, %s121
      %p125 = pneg %p119
      %p126 = scmp.eq.s32.totalorder %s21, 1
      %p127 = por %p125, %p126
      %p128 = scmp.ne.s32.totalorder %s120, %s123
      %p129 = scmp.eq.s32.totalorder %s21, 0
      %p130 = por %p128, %p129
      %p131 = scmp.ne.s32.totalorder %s120, %s123
      %p132 = scmp.eq.s32.totalorder %s26, 1
      %p133 = por %p131, %p132
      %p134 = scmp.ne.s32.totalorder %s123, %s124
      %p135 = scmp.eq.s32.totalorder %s26, 0
      %p136 = por %p134, %p135
      %p137 = scmp.ne.s32.totalorder %s123, %s124
      %p138 = scmp.eq.s32.totalorder %s27, 1
      %p139 = por %p137, %p138
      %p141 = scmp.ne.s32.totalorder %s124, %s140
      %p142 = scmp.eq.s32.totalorder %s27, 0
      %p143 = por %p141, %p142
      %p144 = scmp.le.s32.totalorder 1, %s21
      %p145 = scmp.lt.s32.totalorder %s21, 3
      %p146 = pnand %p144, %p145
      %p147 = pneg %p146
      // Predicated region
      $region9: #{tpu_custom_call.1} parent=5 // pred_check
        _
      $region10: #{tpu_custom_call.1} parent=5 // pred_check_branch
        %149 = sbr.rel (%p146) target = $region12
      $region11: #{tpu_custom_call.1} parent=5 // pred_region
        %s150 = ssub.s32 %s21, 1
      $region12: #{tpu_custom_call.1} parent=5 // pred_fallthru
        _
      %p151 = scmp.lt.s32.totalorder %s21, 2
      // Predicated region
      $region13: #{tpu_custom_call.1} parent=5 // pred_check
        %p152 = pneg %p151
      $region14: #{tpu_custom_call.1} parent=5 // pred_check_branch
        %154 = sbr.rel (%p152) target = $region16
      $region15: #{tpu_custom_call.1} parent=5 // pred_region
        // Predicated region
        $region17: #{tpu_custom_call.1} parent=15 // pred_check
          %p155 = pneg %p68
        $region18: #{tpu_custom_call.1} parent=15 // pred_check_branch
          %157 = sbr.rel (%p155) target = $region20
        $region19: #{tpu_custom_call.1} parent=15 // pred_region
          %s158 = sadd.s32 %s29, %s30
          %p159 = scmp.lt.s32.totalorder %s158, 0
          %s160 = scalar_select %p159, %s158, 0
          %p161 = scmp.lt.s32.totalorder %s28, 1
          %s162 = scalar_select %p161, %s28, 1
          %p163 = scmp.lt.s32.totalorder %s160, 0
          %s164 = scalar_select %p163, %s160, 0
          %s165 = sadd.s32 %s164, %s162
          %s166 = smul.addr %s165, 2
          %s167 = scalar_lea.vmem %s2, %s166
          %s168 = sadd.s32 %s29, %s30
          %p169 = scmp.lt.s32.totalorder %s168, 0
          %s170 = scalar_select %p169, %s168, 0
        $region20: #{tpu_custom_call.1} parent=15 // pred_fallthru
          _
        // Predicated region
        $region21: #{tpu_custom_call.1} parent=15 // pred_check
          %p171 = pneg %p102
        $region22: #{tpu_custom_call.1} parent=15 // pred_check_branch
          %173 = sbr.rel (%p171) target = $region24
        $region23: #{tpu_custom_call.1} parent=15 // pred_region
          %s174 = sadd.s32 %s29, %s30
          %p175 = scmp.lt.s32.totalorder %s174, 0
          %s176 = scalar_select %p175, %s174, 0
          %p177 = scmp.lt.s32.totalorder %s28, 1
          %s178 = scalar_select %p177, %s28, 1
          %p179 = scmp.lt.s32.totalorder %s176, 0
          %s180 = scalar_select %p179, %s176, 0
          %s181 = sadd.s32 %s180, %s178
          %s182 = smul.addr %s181, 2
          %s183 = scalar_lea.vmem %s3, %s182
          %s184 = sadd.s32 %s29, %s30
          %p185 = scmp.lt.s32.totalorder %s184, 0
          %s186 = scalar_select %p185, %s184, 0
        $region24: #{tpu_custom_call.1} parent=15 // pred_fallthru
          _
      $region16: #{tpu_custom_call.1} parent=5 // pred_fallthru
        _
      %p187 = scmp.le.s32.totalorder 1, %s21
      %p188 = scmp.lt.s32.totalorder %s21, 3
      %p189 = pnand %p187, %p188
      %p190 = pneg %p189
      // Predicated region
      $region25: #{tpu_custom_call.1} parent=5 // pred_check
        _
      $region26: #{tpu_custom_call.1} parent=5 // pred_check_branch
        %192 = sbr.rel (%p189) target = $region28
      $region27: #{tpu_custom_call.1} parent=5 // pred_region
        %s193 = ssub.s32 %s21, 1
        %s194 = sadd.s32 %s32, %s33
        %p195 = scmp.lt.s32.totalorder %s194, 0
        %s196 = scalar_select %p195, %s194, 0
        %p197 = scmp.lt.s32.totalorder %s31, 1
        %s198 = scalar_select %p197, %s31, 1
        %p199 = scmp.lt.s32.totalorder %s196, 0
        %s200 = scalar_select %p199, %s196, 0
        %s201 = sadd.s32 %s200, %s198
        %s202 = smul.addr %s201, 2
        %s203 = scalar_lea.vmem %s2, %s202
        %p204 = pneg %p74
        %p205 = pneg %p71
        %s206 = sadd.s32 %s32, %s33
        %p207 = scmp.lt.s32.totalorder %s206, 0
        %s208 = scalar_select %p207, %s206, 0
        %p209 = scmp.lt.s32.totalorder %s31, 1
        %s210 = scalar_select %p209, %s31, 1
        %p211 = scmp.lt.s32.totalorder %s208, 0
        %s212 = scalar_select %p211, %s208, 0
        %s213 = sadd.s32 %s212, %s210
        %s214 = smul.addr %s213, 2
        %s215 = scalar_lea.vmem %s3, %s214
        %p216 = pneg %p108
        %p217 = pneg %p105
        %p218 = pneg %p136
        %p219 = pneg %p133
        %s220 = sand.u32 %s123, 1
        %s221 = scalar_lea.sflag [#allocation6], %s220
        %s222 = sand.u32 %s123, 1
        %s223 = scalar_lea.vmem [#allocation5], %s222
        %s224 = sadd.s32 %s32, %s33
        %p225 = scmp.lt.s32.totalorder %s224, 0
        %s226 = scalar_select %p225, %s224, 0
        %p227 = scmp.lt.s32.totalorder %s31, 1
        %s228 = scalar_select %p227, %s31, 1
        %p229 = scmp.lt.s32.totalorder %s226, 0
        %s230 = scalar_select %p229, %s226, 0
        %s231 = sadd.s32 %s230, %s228
        %s232 = smul.addr %s231, 2
        %s233 = scalar_lea.vmem %s2, %s232
        %s234 = sadd.s32 %s32, %s33
        %p235 = scmp.lt.s32.totalorder %s234, 0
        %s236 = scalar_select %p235, %s234, 0
        %s237 = sadd.s32 %s32, %s33
        %p238 = scmp.lt.s32.totalorder %s237, 0
        %s239 = scalar_select %p238, %s237, 0
        %p240 = scmp.lt.s32.totalorder %s31, 1
        %s241 = scalar_select %p240, %s31, 1
        %p242 = scmp.lt.s32.totalorder %s239, 0
        %s243 = scalar_select %p242, %s239, 0
        %s244 = sadd.s32 %s243, %s241
        %s245 = smul.addr %s244, 2
        %s246 = scalar_lea.vmem %s3, %s245
        %s247 = sadd.s32 %s32, %s33
        %p248 = scmp.lt.s32.totalorder %s247, 0
        %s249 = scalar_select %p248, %s247, 0
        %p250 = scmp.eq.s32.totalorder %s33, 0
        // Predicated region
        $region29: #{tpu_custom_call.1} parent=27 // pred_check
          %p251 = pneg %p250
        $region30: #{tpu_custom_call.1} parent=27 // pred_check_branch
          %253 = sbr.rel (%p251) target = $region32
        $region31: #{tpu_custom_call.1} parent=27 // pred_region
          %254 = vst [vmem:[%s223] sm:$0x1] 0.0
        $region32: #{tpu_custom_call.1} parent=27 // pred_fallthru
          _
        %s255 = sld [smem:[#allocation3 + %s31]]
        %s256 = sld [smem:[#allocation4 + %s31]]
        %v257 = vld [vmem:[%s233] sm:$0x3]
        %v258 = vld [vmem:[%s246] sm:$0x3]
        %v259 = vmax.f32 %v257, 1e-05
        %v260 = vmin.f32 %v259, 0.99999
        %v261 = vlog2.pop %v260
        %v262 = vmul.f32 %v261, 0.6931472
        %v263 = vmul.f32 %v258, %v262
        %v264 = vstv %s255
        %v265 = vmul.f32 %v264, %v263
        %v266 = vsub.f32 1.0, %v258
        %v267 = vsub.f32 1.0, %v260
        %v268 = vlog2.pop %v267
        %v269 = vmul.f32 %v268, 0.6931472
        %v270 = vmul.f32 %v266, %v269
        %v271 = vstv %s256
        %v272 = vmul.f32 %v271, %v270
        %v273 = vadd.f32 %v265, %v272
        %vm274 = vcmask 1041408
        %v275 = vsel %vm274, %v273, 0.0
        %v276 = vrot.slane %v275, 4
        %v277 = vadd.f32 %v275, %v276
        %v278 = vrot.slane %v277, 2
        %v279 = vadd.f32 %v277, %v278
        %v280 = vrot.slane %v279, 1
        %v281 = vadd.f32 %v279, %v280
        %v282 = vadd.f32 %v281, 0.0
        %v283 = vld [vmem:[%s223] sm:$0x1]
        %v284 = vadd.f32 %v283, %v282
        %285 = vst [vmem:[%s223] sm:$0x1] %v284
        %s286 = sand.u32 %s123, 1
        %s287 = scalar_lea.sflag [#allocation6], %s286
        %s288 = sand.u32 %s123, 1
        %s289 = scalar_lea.vmem [#allocation5], %s288
        // Predicated region
        $region33: #{tpu_custom_call.1} parent=27 // pred_check
          %p290 = pneg %p133
        $region34: #{tpu_custom_call.1} parent=27 // pred_check_branch
          %292 = sbr.rel (%p290) target = $region36
        $region35: #{tpu_custom_call.1} parent=27 // pred_region
          %s294 = ssub.s32 16, 16
          %295 = vsyncadd %s287, %s294
          %s296 = sadd.s32 %s32, %s31
          %s297 = smul.addr %s296, 16
          %s298 = scalar_lea.hbm %s4, %s297
          %s300 = sshll.u32 %s289, 4
          %s301 = int_to_ptr.vmem [resolvable:$true] %s300
          %303 = dma.vmem_to_hbm [thread:$0]  %s301, 16, %s298, %s287
        $region36: #{tpu_custom_call.1} parent=27 // pred_fallthru
          _
      $region28: #{tpu_custom_call.1} parent=5 // pred_fallthru
        _
      %p304 = scmp.le.s32.totalorder 2, %s21
      // Predicated region
      $region37: #{tpu_custom_call.1} parent=5 // pred_check
        %p305 = pneg %p304
      $region38: #{tpu_custom_call.1} parent=5 // pred_check_branch
        %307 = sbr.rel (%p305) target = $region40
      $region39: #{tpu_custom_call.1} parent=5 // pred_region
        %s308 = ssub.s32 %s21, 2
        // Predicated region
        $region41: #{tpu_custom_call.1} parent=39 // pred_check
          %p309 = pneg %p139
        $region42: #{tpu_custom_call.1} parent=39 // pred_check_branch
          %311 = sbr.rel (%p309) target = $region44
        $region43: #{tpu_custom_call.1} parent=39 // pred_region
          %s312 = sand.u32 %s124, 1
          %s313 = scalar_lea.sflag [#allocation6], %s312
          %s314 = sand.u32 %s124, 1
          %s315 = scalar_lea.vmem [#allocation5], %s314
          %316 = dma.done %s313, 16
        $region44: #{tpu_custom_call.1} parent=39 // pred_fallthru
          _
      $region40: #{tpu_custom_call.1} parent=5 // pred_fallthru
        _
    $region6: #{tpu_custom_call.1} parent=1 // loop_footer
      %s25 = sadd.s32 1, %s21
    $region7: #{tpu_custom_call.1} parent=1 // loop_footer_branch
      %20 = sbr.rel target = $region3
    $region8: #{tpu_custom_call.1} parent=1 // loop_exit
      _
    %317 = vsyncpa [#allocation6], 1
    %s318 = scalar_lea.sflag [#allocation6], 1
    %319 = vsyncpa %s318, 1

</llo_original>
